<compile_context>
chip_gen: v6e
topology: v6e:2x2x1
jax: 0.10.0
libtpu: 0.0.40
codegen_flags: <defaults>
</compile_context>

<pallas_src>
import jax
import jax.numpy as jnp
from jax.experimental import pallas as pl
from jax.experimental.pallas import tpu as pltpu


def model_kernel(x_ref, p_ref, h_ref):
    """Folded affine map for the whole forward chain; tiny shapes -> 1 block.

    x_ref: (B, 2)   input
    p_ref: (3, 4)   rows 0-1 = W_eff, row 2 = b_eff (packed parameters)
    h_ref: (B, 4)   core output (the 3x lane replication happens outside)
    """
    x = x_ref[...]            # (B, 2)
    w0 = p_ref[0:1, :]        # (1, 4)  folded weight, row 0
    w1 = p_ref[1:2, :]        # (1, 4)  folded weight, row 1
    b = p_ref[2:3, :]         # (1, 4)  folded bias

    # K=2 contraction as explicit VPU broadcast-multiply-adds (skip the MXU).
    # Single full-block store -- no lane-offset masked stores.
    h_ref[...] = x[:, 0:1] * w0 + x[:, 1:2] * w1 + b


def fold_params(w1, b1, w2, b2):
    """Fold the whole affine chain into one (2,4) weight + (1,4) bias,
    packed together as a single (3,4) array. Done once, off the hot path."""
    w1t = w1.T                    # (2, 4)   layers.weight^T
    w2t = w2.T                    # (12, 2)  layers2.weight^T
    b1r = b1.reshape(1, -1)       # (1, 4)
    b2r = b2.reshape(1, -1)       # (1, 2)

    # cat(h, h, h) @ W2^T  ==  h @ (W2^T[0:4] + W2^T[4:8] + W2^T[8:12])
    w2f = w2t[0:4, :] + w2t[4:8, :] + w2t[8:12, :]            # (4, 2)

    w_eff = w1t @ w2f @ w1t                                   # (2, 4)
    b_eff = (b1r @ w2f + b2r) @ w1t + b1r                     # (1, 4)
    return jnp.concatenate([w_eff, b_eff], axis=0)            # (3, 4) packed


def make_forward(params):
    """Build the jitted forward given the packed (3,4) parameters."""

    @jax.jit
    def forward(x):
        B = x.shape[0]
        h = pl.pallas_call(
            model_kernel,
            out_shape=jax.ShapeDtypeStruct((B, 4), jnp.float32),
            in_specs=[
                pl.BlockSpec(memory_space=pltpu.MemorySpace.VMEM),
                pl.BlockSpec(memory_space=pltpu.MemorySpace.VMEM),
            ],
            out_specs=pl.BlockSpec(memory_space=pltpu.MemorySpace.VMEM),
        )(x, params)
        # out = torch.cat((h, h, h), dim=1): replication outside the kernel,
        # where XLA fuses it for free.
        return jnp.tile(h, (1, 3))

    return forward


def init_params(key):
    """Deterministic PyTorch-style (uniform +/- 1/sqrt(fan_in)) init."""
    k1, k2, k3, k4 = jax.random.split(key, 4)
    # layers = Linear(2, 4)
    bound1 = 1.0 / jnp.sqrt(2.0)
    w1 = jax.random.uniform(k1, (4, 2), jnp.float32, -bound1, bound1)
    b1 = jax.random.uniform(k2, (4,), jnp.float32, -bound1, bound1)
    # layers2 = Linear(12, 2)   (see TODO(synk) note above)
    bound2 = 1.0 / jnp.sqrt(12.0)
    w2 = jax.random.uniform(k3, (2, 12), jnp.float32, -bound2, bound2)
    b2 = jax.random.uniform(k4, (2,), jnp.float32, -bound2, bound2)
    return w1, b1, w2, b2


if __name__ == "__main__":
    key = jax.random.PRNGKey(0)
    k_x, k_p = jax.random.split(key)

    x = jax.random.normal(k_x, (2, 2), dtype=jnp.float32)
    w1, b1, w2, b2 = init_params(k_p)

    # One-time algebraic fold + pack, outside the per-call path.
    params = fold_params(w1, b1, w2, b2)
    forward = make_forward(params)

    out = forward(x)
    out = jax.block_until_ready(out)

    # Pure-JAX reference of the ORIGINAL (unfolded, repaired) chain.
    h1 = x @ w1.T + b1
    c1 = jnp.concatenate([h1, h1, h1], axis=1)
    h2 = c1 @ w2.T + b2
    h3 = h2 @ w1.T + b1
    ref = jnp.concatenate([h3, h3, h3], axis=1)

    assert out.shape == (2, 12), f"bad output shape {out.shape}"
    assert jnp.allclose(out, ref, atol=1e-5, rtol=1e-5), (
        f"max abs err {jnp.max(jnp.abs(out - ref))}")

    print("KERNEL_OK")
</pallas_src>

<mosaic_0001>
module attributes {stable_mosaic.version = 11 : i64} {
  func.func @model_kernel(%arg0: memref<2x2xf32, #tpu.memory_space<vmem>>, %arg1: memref<3x4xf32, #tpu.memory_space<vmem>>, %arg2: memref<2x4xf32, #tpu.memory_space<vmem>>) attributes {dimension_semantics = [], scalar_prefetch = 0 : i64, scratch_operands = 0 : i64, tpu.core_type = #tpu.core_type<tc>} {
    %c0 = arith.constant 0 : index
    %c0_0 = arith.constant 0 : index
    %0 = vector.load %arg0[%c0, %c0_0] : memref<2x2xf32, #tpu.memory_space<vmem>>, vector<2x2xf32>
    %c0_1 = arith.constant 0 : index
    %c0_2 = arith.constant 0 : index
    %1 = vector.load %arg1[%c0_1, %c0_2] : memref<3x4xf32, #tpu.memory_space<vmem>>, vector<1x4xf32>
    %c1 = arith.constant 1 : index
    %c0_3 = arith.constant 0 : index
    %2 = vector.load %arg1[%c1, %c0_3] : memref<3x4xf32, #tpu.memory_space<vmem>>, vector<1x4xf32>
    %c2 = arith.constant 2 : index
    %c0_4 = arith.constant 0 : index
    %3 = vector.load %arg1[%c2, %c0_4] : memref<3x4xf32, #tpu.memory_space<vmem>>, vector<1x4xf32>
    %4 = vector.extract_strided_slice %0 {offsets = [0, 0], sizes = [2, 1], strides = [1, 1]} : vector<2x2xf32> to vector<2x1xf32>
    %5 = vector.broadcast %4 : vector<2x1xf32> to vector<2x4xf32>
    %6 = vector.broadcast %1 : vector<1x4xf32> to vector<2x4xf32>
    %7 = arith.mulf %5, %6 : vector<2x4xf32>
    %8 = vector.extract_strided_slice %0 {offsets = [0, 1], sizes = [2, 1], strides = [1, 1]} : vector<2x2xf32> to vector<2x1xf32>
    %9 = vector.broadcast %8 : vector<2x1xf32> to vector<2x4xf32>
    %10 = vector.broadcast %2 : vector<1x4xf32> to vector<2x4xf32>
    %11 = arith.mulf %9, %10 : vector<2x4xf32>
    %12 = arith.addf %7, %11 : vector<2x4xf32>
    %13 = vector.broadcast %3 : vector<1x4xf32> to vector<2x4xf32>
    %14 = arith.addf %12, %13 : vector<2x4xf32>
    %c0_5 = arith.constant 0 : index
    %c0_6 = arith.constant 0 : index
    %15 = vector.load %arg2[%c0_5, %c0_6] : memref<2x4xf32, #tpu.memory_space<vmem>>, vector<2x4xf32>
    tpu.vector_store %arg2[%c0_5, %c0_6], %14 {strides = array<i32>} : memref<2x4xf32, #tpu.memory_space<vmem>>, vector<2x4xf32>,
    return
  }
}

</mosaic_0001>

<llo_original>
// kernel: tile.9
$region0: #{tile.9}
  %s0 = inlined_call_operand.vmem [shape: f32[2,3,4], index: 0, kind: input, shape index: {}]
  %s1 = inlined_call_operand.hbm [shape: f32[2,12], index: 1, kind: output, shape index: {}]
  $region1: #{tile.9} parent=0
    #allocation0 [shape = 'u8[1024]{0}', space=vmem, size = 0x400, scoped, tag = 'operand span for operand 1']
    #allocation1 [shape = 's32[1]{0}', space=sflag, size = 0x4, scoped, tag = 'scoped memory for tile.9']
    #allocation2 [shape = 'u8[4096]{0}', space=vmem, size = 0x1000, scoped, tag = 'scoped mem for output reshape']
    #allocation3 [shape = 'u8[8192]{0}', space=vmem, size = 0x2000, scoped, tag = 'scoped mem for input reshape']
    %2 = vsyncpa [#allocation1], 0
    %s4 = sshll.u32 1, 4
    %s5 = ssub.s32 %s4, 1
    %s6 = scalar_lea.vmem %s0, 4
    %v7 = vld [vmem:[%s6] sm:%s5]
    %s8 = scalar_lea.vmem [#allocation3], 8
    %9 = vst [vmem:[%s8] sm:%s5] %v7
    %v10 = vld [vmem:[%s0] sm:%s5]
    %11 = vst [vmem:[#allocation3] sm:%s5] %v10
    %s12 = smov 3
    %v13 = vld [vmem:[#allocation3] ss:$8 sm:%s12]
    %vm14 = vcmask 31744
    %15 = vst.msk [vmem:[#allocation2] sm:$0x3] %vm14, %v13
    %s16 = scalar_lea.vmem [#allocation3], 2
    %s17 = smov 3
    %v18 = vld [vmem:[%s16] ss:$8 sm:%s17]
    %19 = vrot.lane.b32.xlu0 %v18, 8
    %v20 = vpop.permute.xlu0 %19
    %vm21 = vcmask 97344
    %22 = vst.msk [vmem:[#allocation2] sm:$0x3] %vm21, %v20
    %s23 = scalar_lea.vmem [#allocation3], 1
    %s24 = smov 3
    %v25 = vld [vmem:[%s23] ss:$8 sm:%s24]
    %26 = vrot.lane.b32.xlu0 %v25, 4
    %v27 = vpop.permute.xlu0 %26
    %vm28 = vcmask 64544
    %29 = vst.msk [vmem:[#allocation2] sm:$0x3] %vm28, %v27
    %s31 = sshll.u32 1, 2
    %s32 = ssub.s32 %s31, 1
    %v34 = vld [vmem:[#allocation2] sm:%s32]
    %s35 = sshll.u32 1, 2
    %s36 = ssub.s32 %s35, 1
    %37 = vst [vmem:[#allocation0] sm:%s36] %v34
    %s39 = ssub.s32 32, 32
    %40 = vsyncadd [#allocation1], %s39
    %s42 = sshll.u32 [#allocation0], 4
    %s43 = int_to_ptr.vmem [resolvable:$true] %s42
    %45 = dma.vmem_to_hbm [thread:$0]  %s43, 32, %s1, [#allocation1]
    %46 = dma.done [#allocation1], 32
    %47 = vsyncpa [#allocation1], 1

// kernel: forward.1
$region0: #{forward.1}
  #allocation0 [shape = 'u32[]', space=smem, size = 0x4, offset = 0x4, fixed_abs, tag = 'smem constant byte address 0x4 - core index']
  #allocation1 [shape = 'u32[144,128]{1,0:T(1,128)}', space=vmem, size = 0x12000, scoped, tag = 'internal scratch']
  %s0 = inlined_call_operand.hbm [shape: f32[2,2], index: 0, kind: input, shape index: {}]
  %s1 = inlined_call_operand.hbm [shape: f32[3,4], index: 1, kind: input, shape index: {}]
  %s2 = inlined_call_operand.vmem [shape: f32[2,4], index: 2, kind: output, shape index: {}]
  %s3 = sld [smem:[#allocation0]]
  $region26: #{forward.1} parent=0
    _
  %s5 = ssub.s32 1, %s3
  %s6 = scalar_select 0, %s5, %s3
  $region1: #{forward.1} parent=0
    #allocation2 [shape = 'u8[1024]{0}', space=vmem, size = 0x400, scoped, tag = 'input window, operand 0, single buffered']
    #allocation3 [shape = 's32[1]{0}', space=sflag, size = 0x4, scoped, tag = 'scoped memory for forward.1']
    #allocation4 [shape = 'u8[2048]{0}', space=vmem, size = 0x800, scoped, tag = 'input window, operand 1, single buffered']
    #allocation5 [shape = 's32[1]{0}', space=sflag, size = 0x4, scoped, tag = 'scoped memory for forward.1']
    %7 = vsyncpa [#allocation3], 0
    %8 = vsyncpa [#allocation5], 0
    // Predicated region
    $region2: #{forward.1} parent=1 // pred_check
      _
    $region3: #{forward.1} parent=1 // pred_check_branch
      %10 = sbr.rel (0) target = $region5
    $region4: #{forward.1} parent=1 // pred_region
      %s12 = ssub.s32 32, 32
      %13 = vsyncadd [#allocation3], %s12
      %s15 = sshll.u32 [#allocation2], 4
      %s16 = int_to_ptr.vmem [resolvable:$true] %s15
      %18 = dma.hbm_to_vmem [thread:$0]  %s0, 32, %s16, [#allocation3]
    $region5: #{forward.1} parent=1 // pred_fallthru
      _
    // Predicated region
    $region6: #{forward.1} parent=1 // pred_check
      _
    $region7: #{forward.1} parent=1 // pred_check_branch
      %20 = sbr.rel (0) target = $region9
    $region8: #{forward.1} parent=1 // pred_region
      %s22 = ssub.s32 64, 64
      %23 = vsyncadd [#allocation5], %s22
      %s25 = sshll.u32 [#allocation4], 4
      %s26 = int_to_ptr.vmem [resolvable:$true] %s25
      %28 = dma.hbm_to_vmem [thread:$0]  %s1, 64, %s26, [#allocation5]
    $region9: #{forward.1} parent=1 // pred_fallthru
      _
    // Predicated region
    $region10: #{forward.1} parent=1 // pred_check
      _
    $region11: #{forward.1} parent=1 // pred_check_branch
      %30 = sbr.rel (0) target = $region13
    $region12: #{forward.1} parent=1 // pred_region
      %31 = dma.done [#allocation3], 32
    $region13: #{forward.1} parent=1 // pred_fallthru
      _
    // Predicated region
    $region14: #{forward.1} parent=1 // pred_check
      _
    $region15: #{forward.1} parent=1 // pred_check_branch
      %33 = sbr.rel (0) target = $region17
    $region16: #{forward.1} parent=1 // pred_region
      %34 = dma.done [#allocation5], 64
    $region17: #{forward.1} parent=1 // pred_fallthru
      _
    %v35 = vld [vmem:[#allocation2] sm:$0x3]
    %v36 = vld [vmem:[#allocation4] sm:$0x1]
    %v37 = vld [vmem:[#allocation4 + $0x1] sm:$0x1]
    %v38 = vld [vmem:[#allocation4 + $0x2] sm:$0x1]
    %40 = vset.pattern.permute.xlu0 0
    %41 = vperm.xlu0 %40, %v35
    %v42 = vpop.permute.xlu0 %41
    %v44 = vlaneseq
    %v45 = vshrl.u32 %v44, 7
    %v46 = vsub.s32 0, %v45
    %v47 = vrot.slane %v36, %v46
    %v48 = vmul.f32 %v42, %v47
    %49 = vset.pattern.permute.xlu0 1
    %50 = vperm.xlu0 %49, %v35
    %v51 = vpop.permute.xlu0 %50
    %v53 = vlaneseq
    %v54 = vshrl.u32 %v53, 7
    %v55 = vsub.s32 0, %v54
    %v56 = vrot.slane %v37, %v55
    %v57 = vmul.f32 %v51, %v56
    %v58 = vadd.f32 %v48, %v57
    %v59 = vlaneseq
    %v60 = vshrl.u32 %v59, 7
    %v61 = vsub.s32 0, %v60
    %v62 = vrot.slane %v38, %v61
    %v63 = vadd.f32 %v58, %v62
    %vm64 = vcmask 25600
    %65 = vst.msk [vmem:[%s2] sm:$0x3] %vm64, %v63
    // Predicated region
    $region18: #{forward.1} parent=1 // pred_check
      _
    $region19: #{forward.1} parent=1 // pred_check_branch
      %67 = sbr.rel (0) target = $region21
    $region20: #{forward.1} parent=1 // pred_region
      _
    $region21: #{forward.1} parent=1 // pred_fallthru
      _
    // Predicated region
    $region22: #{forward.1} parent=1 // pred_check
      _
    $region23: #{forward.1} parent=1 // pred_check_branch
      %69 = sbr.rel (0) target = $region25
    $region24: #{forward.1} parent=1 // pred_region
      _
    $region25: #{forward.1} parent=1 // pred_fallthru
      _
    %70 = vsyncpa [#allocation3], 1
    %71 = vsyncpa [#allocation5], 1

</llo_original>
